<compile_context>
chip_gen: v7x
topology: tpu7x:2x2x1
jax: 0.10.0
libtpu: 0.0.40
codegen_flags: <defaults>
</compile_context>

<pallas_src>
import functools

import jax
import jax.numpy as jnp
from jax import lax
from jax.experimental import pallas as pl
from jax.experimental.pallas import tpu as pltpu

_LANES = 128
_MAX_TILE_ROWS = 4096   # 4096 x 128 f32 tile = 2 MiB per pipeline buffer (1 MiB for bf16)


def _round_up(x, m):
    return ((x + m - 1) // m) * m


def _num_tensorcores() -> int:
    """2 on multi-TensorCore chips (v7x / v4 / v5p megacore), else 1 (v5e / v6e)."""
    try:
        kind = jax.devices()[0].device_kind.lower()
    except Exception:
        return 1
    return 2 if any(tag in kind for tag in ("v7", "7x", "v4", "v5p")) else 1


def _fastspeech_loss_kernel(mel_out_ref, mel_tgt_ref, small_pred_ref, small_tgt_ref,
                            out_ref, acc_ref, small_acc_ref,
                            *, mel_rows, tile_rows, tiles_per_core, rows_s, needs_mask):
    c = pl.program_id(0)          # core-split axis ("parallel")
    i = pl.program_id(1)          # mel tile axis  ("arbitrary" reduction)
    n_i = pl.num_programs(1)

    @pl.when(i == 0)
    def _init():
        acc_ref[...] = jnp.zeros_like(acc_ref)
        small_acc_ref[0] = jnp.float32(0.0)
        small_acc_ref[1] = jnp.float32(0.0)
        small_acc_ref[2] = jnp.float32(0.0)

    # Small losses: ~1/n_mels of the bytes, VMEM-resident (constant block index), computed
    # exactly once on core 0 / step 0.  Zero padding is exact: 0 - log1p(0) = 0.
    @pl.when(jnp.logical_and(i == 0, c == 0))
    def _small_losses():
        d = small_pred_ref[...] - jnp.log1p(small_tgt_ref[...])
        sq = d * d
        small_acc_ref[0] = jnp.sum(sq[0 * rows_s:1 * rows_s])   # duration vs log1p(length)
        small_acc_ref[1] = jnp.sum(sq[1 * rows_s:2 * rows_s])   # energy   vs log1p(energy)
        small_acc_ref[2] = jnp.sum(sq[2 * rows_s:3 * rows_s])   # pitch    vs log1p(pitch)

    # Steady state: native-dtype DMA, cast in-register, masked diff, and accumulate into an
    # (8,128) f32 VMEM vector accumulator (pure VPU adds that hide under the next DMA).
    o = mel_out_ref[...].astype(jnp.float32)
    t = mel_tgt_ref[...].astype(jnp.float32)
    d = o - t
    if needs_mask:
        # Rows past mel_rows belong to the implicitly padded last block (unspecified data)
        # or to a duplicated/clamped block on the other core -> zero their contribution
        # BEFORE squaring (garbage could be inf/NaN).
        block_idx = c * tiles_per_core + i
        row0 = block_idx * tile_rows
        rid = row0 + lax.broadcasted_iota(jnp.int32, (tile_rows, _LANES), 0)
        d = jnp.where(rid < mel_rows, d, 0.0)
    sq = d * d
    acc_ref[...] = acc_ref[...] + jnp.sum(sq.reshape(tile_rows // 8, 8, _LANES), axis=0)

    # Finalize (once per core): one XLU reduce of the vector accumulator, then write this
    # core's partial sums into sublane 0, lanes 0..3 of its lane-dense (8,128) output block.
    @pl.when(i == n_i - 1)
    def _finalize():
        mel_sum = jnp.sum(acc_ref[...])
        lane = lax.broadcasted_iota(jnp.int32, (8, _LANES), 1)
        sub = lax.broadcasted_iota(jnp.int32, (8, _LANES), 0)
        row0m = sub == 0
        vals = jnp.where(jnp.logical_and(row0m, lane == 0), mel_sum, 0.0)
        vals = vals + jnp.where(jnp.logical_and(row0m, lane == 1), small_acc_ref[0], 0.0)
        vals = vals + jnp.where(jnp.logical_and(row0m, lane == 2), small_acc_ref[1], 0.0)
        vals = vals + jnp.where(jnp.logical_and(row0m, lane == 3), small_acc_ref[2], 0.0)
        out_ref[...] = vals


def fastspeech_loss(mel_output, duration_predictor_output, pitch_predictor_output,
                    energy_predictor_output, mel_target, length_target,
                    energy_target, pitch_target):
    mel_size = int(mel_output.size)
    small_size = int(duration_predictor_output.size)

    num_cores = _num_tensorcores()

    # ---- mel: lane-dense (rows, 128) view of the flat array, native dtype, no copy when
    #      numel % 128 == 0 (ragged row counts handled by the in-kernel mask). -------------
    lane_pad_len = _round_up(max(mel_size, 1), _LANES)
    padded_len = max(lane_pad_len, 16 * _LANES)   # keep >= one 16-row tile

    def _as_rows(x):
        flat = jnp.ravel(x)                        # keep native dtype (bf16 stays bf16)
        if padded_len != mel_size:
            # Only when numel % 128 != 0 or the tensor is tiny; otherwise copy-free reshape.
            flat = jnp.pad(flat, (0, padded_len - mel_size))
        return flat.reshape(padded_len // _LANES, _LANES)

    mel_o2d = _as_rows(mel_output)
    mel_t2d = _as_rows(mel_target)
    mel_rows = padded_len // _LANES

    if mel_rows < num_cores * 16:
        num_cores = 1

    rows_per_core = -(-mel_rows // num_cores)
    tile_rows = min(_MAX_TILE_ROWS, _round_up(rows_per_core, 16))
    tile_rows = min(tile_rows, (mel_rows // 16) * 16)       # block never exceeds the array
    tiles_total = -(-mel_rows // tile_rows)
    tiles_per_core = -(-tiles_total // num_cores)
    needs_mask = (num_cores * tiles_per_core * tile_rows != mel_rows)

    if num_cores * tiles_per_core == tiles_total:
        mel_idx = lambda c, i: (c * tiles_per_core + i, 0)
    else:
        last_blk = tiles_total - 1                           # clamp; masked in-kernel
        mel_idx = lambda c, i: (jnp.minimum(c * tiles_per_core + i, last_blk), 0)

    # ---- small losses: sublane-dense (3*rows_s, 128) packing, one DMA per array ----------
    rows_s = max(1, -(-small_size // _LANES))
    cols = rows_s * _LANES

    def _pack_small(parts):
        mats = []
        for v in parts:
            flat = jnp.ravel(v).astype(jnp.float32)
            flat = jnp.pad(flat, (0, cols - small_size))
            mats.append(flat.reshape(rows_s, _LANES))
        return jnp.concatenate(mats, axis=0)

    small_pred = _pack_small([duration_predictor_output,
                              energy_predictor_output,
                              pitch_predictor_output])
    small_tgt = _pack_small([length_target, energy_target, pitch_target])

    kernel = functools.partial(
        _fastspeech_loss_kernel,
        mel_rows=mel_rows, tile_rows=tile_rows, tiles_per_core=tiles_per_core,
        rows_s=rows_s, needs_mask=needs_mask)

    # ---- VMEM budget (double-buffered inputs + resident small blocks + output + acc) -----
    mel_tile_bytes = tile_rows * _LANES * (mel_o2d.dtype.itemsize + mel_t2d.dtype.itemsize)
    small_block_bytes = 3 * rows_s * _LANES * 4
    vmem_needed = (2 * mel_tile_bytes            # 2 mel inputs, double-buffered
                   + 2 * 2 * small_block_bytes   # 2 small inputs, double-buffered
                   + 2 * 8 * _LANES * 4          # output block, double-buffered
                   + 8 * _LANES * 4)             # vector accumulator scratch
    vmem_limit = int(min(max(2 * vmem_needed + (4 << 20), 16 << 20), 56 << 20))

    bytes_accessed = (mel_output.size * mel_output.dtype.itemsize
                      + mel_target.size * mel_target.dtype.itemsize
                      + 2 * small_pred.size * 4
                      + num_cores * 8 * _LANES * 4)
    cost = pl.CostEstimate(flops=int(3 * mel_size + 9 * max(small_size, 1)),
                           transcendentals=int(3 * max(small_size, 1)),
                           bytes_accessed=int(bytes_accessed))

    out = pl.pallas_call(
        kernel,
        out_shape=jax.ShapeDtypeStruct((num_cores * 8, _LANES), jnp.float32),
        grid_spec=pltpu.PrefetchScalarGridSpec(
            num_scalar_prefetch=0,
            grid=(num_cores, tiles_per_core),
            in_specs=[
                pl.BlockSpec((tile_rows, _LANES), mel_idx),
                pl.BlockSpec((tile_rows, _LANES), mel_idx),
                pl.BlockSpec((3 * rows_s, _LANES), lambda c, i: (0, 0)),
                pl.BlockSpec((3 * rows_s, _LANES), lambda c, i: (0, 0)),
            ],
            out_specs=pl.BlockSpec((8, _LANES), lambda c, i: (c, 0)),
            scratch_shapes=[pltpu.VMEM((8, _LANES), jnp.float32),   # mel vector accumulator
                            pltpu.SMEM((3,), jnp.float32)],         # dur / energy / pitch
        ),
        compiler_params=pltpu.CompilerParams(
            dimension_semantics=("parallel", "arbitrary"),
            vmem_limit_bytes=vmem_limit),
        cost_estimate=cost,
    )(mel_o2d, mel_t2d, small_pred, small_tgt)

    # Wrapper epilogue: add the per-core partial sums, then divide by the true sizes.
    sums = jnp.sum(out.reshape(num_cores, 8, _LANES), axis=(0, 1))
    mel_loss = sums[0] / mel_size
    duration_loss = sums[1] / small_size
    energy_loss = sums[2] / small_size
    pitch_loss = sums[3] / small_size
    return mel_loss, duration_loss, energy_loss, pitch_loss


def _reference(mel_output, dur_out, pitch_out, energy_out,
               mel_target, length_target, energy_target, pitch_target):
    mo = mel_output.astype(jnp.float32)
    mt = mel_target.astype(jnp.float32)
    mel_loss = jnp.mean((mo - mt) ** 2)
    dur_loss = jnp.mean((dur_out.astype(jnp.float32)
                         - jnp.log1p(length_target.astype(jnp.float32))) ** 2)
    en_loss = jnp.mean((energy_out.astype(jnp.float32)
                        - jnp.log1p(energy_target.astype(jnp.float32))) ** 2)
    pit_loss = jnp.mean((pitch_out.astype(jnp.float32)
                         - jnp.log1p(pitch_target.astype(jnp.float32))) ** 2)
    return mel_loss, dur_loss, en_loss, pit_loss


if __name__ == "__main__":
    key = jax.random.PRNGKey(0)
    B, T, M = 2, 16, 80   # batch, sequence length, mel channels (B*T*M = 2560, 20 rows)

    ks = jax.random.split(key, 8)
    mel_output = jax.random.normal(ks[0], (B, T, M), dtype=jnp.float32)
    mel_target = jax.random.normal(ks[1], (B, T, M), dtype=jnp.float32)

    duration_predictor_output = jax.random.normal(ks[2], (B, T), dtype=jnp.float32)
    pitch_predictor_output = jax.random.normal(ks[3], (B, T), dtype=jnp.float32)
    energy_predictor_output = jax.random.normal(ks[4], (B, T), dtype=jnp.float32)

    length_target = jax.random.randint(ks[5], (B, T), 1, 10, dtype=jnp.int32)
    energy_target = jax.random.uniform(ks[6], (B, T), dtype=jnp.float32, minval=0.0, maxval=5.0)
    pitch_target = jax.random.uniform(ks[7], (B, T), dtype=jnp.float32, minval=0.0, maxval=5.0)

    def _check(mel_o, mel_t):
        got = fastspeech_loss(mel_o, duration_predictor_output, pitch_predictor_output,
                              energy_predictor_output, mel_t, length_target,
                              energy_target, pitch_target)
        got = jax.block_until_ready(got)
        want = _reference(mel_o, duration_predictor_output, pitch_predictor_output,
                          energy_predictor_output, mel_t, length_target,
                          energy_target, pitch_target)
        for g, w in zip(got, want):
            g, w = float(g), float(w)
            assert abs(g - w) <= 1e-4 + 1e-4 * abs(w), (g, w)
        return got

    # f32 mels: copy-free (rows,128) reshape + masked partial last tile.
    _check(mel_output, mel_target)
    # bf16 mels: native-dtype DMA, in-kernel cast to f32.
    _check(mel_output.astype(jnp.bfloat16), mel_target.astype(jnp.bfloat16))

    print("KERNEL_OK")
</pallas_src>

<mosaic_0001>
module attributes {stable_mosaic.version = 11 : i64} {
  func.func @_fastspeech_loss_kernel(%arg0: i32, %arg1: i32, %arg2: memref<16x128xf32, #tpu.memory_space<vmem>>, %arg3: memref<16x128xf32, #tpu.memory_space<vmem>>, %arg4: memref<3x128xf32, #tpu.memory_space<vmem>>, %arg5: memref<3x128xf32, #tpu.memory_space<vmem>>, %arg6: memref<8x128xf32, #tpu.memory_space<vmem>>, %arg7: memref<8x128xf32, #tpu.memory_space<vmem>>, %arg8: memref<3xf32, #tpu.memory_space<smem>>) attributes {dimension_semantics = [#tpu.dimension_semantics<parallel>, #tpu.dimension_semantics<arbitrary>], iteration_bounds = array<i64: 1, 2>, scalar_prefetch = 0 : i64, scratch_operands = 2 : i64, tpu.core_type = #tpu.core_type<tc>, window_params = [{transform_indices = @transform_0, window_bounds = array<i64: 16, 128>}, {transform_indices = @transform_1, window_bounds = array<i64: 16, 128>}, {pipeline_mode = #tpu.pipeline_mode<synchronous>, transform_indices = @transform_2, window_bounds = array<i64: 3, 128>}, {pipeline_mode = #tpu.pipeline_mode<synchronous>, transform_indices = @transform_3, window_bounds = array<i64: 3, 128>}, {transform_indices = @transform_4, window_bounds = array<i64: 8, 128>}]} {
    %c0_i32 = arith.constant 0 : i32
    %0 = arith.cmpi eq, %arg1, %c0_i32 : i32
    %1 = arith.extui %0 : i1 to i32
    %c0_i32_0 = arith.constant 0 : i32
    %2 = arith.cmpi ne, %1, %c0_i32_0 : i32
    scf.if %2 {
      %cst_13 = arith.constant 0.000000e+00 : f32
      %30 = vector.broadcast %cst_13 : f32 to vector<8x128xf32>
      %c0_14 = arith.constant 0 : index
      %c0_15 = arith.constant 0 : index
      %31 = vector.load %arg7[%c0_14, %c0_15] : memref<8x128xf32, #tpu.memory_space<vmem>>, vector<8x128xf32>
      tpu.vector_store %arg7[%c0_14, %c0_15], %30 {strides = array<i32>} : memref<8x128xf32, #tpu.memory_space<vmem>>, vector<8x128xf32>,
      %cst_16 = arith.constant 0.000000e+00 : f32
      %c0_17 = arith.constant 0 : index
      %32 = memref.load %arg8[%c0_17] : memref<3xf32, #tpu.memory_space<smem>>
      memref.store %cst_16, %arg8[%c0_17] : memref<3xf32, #tpu.memory_space<smem>>
      %cst_18 = arith.constant 0.000000e+00 : f32
      %c1 = arith.constant 1 : index
      %33 = memref.load %arg8[%c1] : memref<3xf32, #tpu.memory_space<smem>>
      memref.store %cst_18, %arg8[%c1] : memref<3xf32, #tpu.memory_space<smem>>
      %cst_19 = arith.constant 0.000000e+00 : f32
      %c2 = arith.constant 2 : index
      %34 = memref.load %arg8[%c2] : memref<3xf32, #tpu.memory_space<smem>>
      memref.store %cst_19, %arg8[%c2] : memref<3xf32, #tpu.memory_space<smem>>
    } else {
    }
    %c0_i32_1 = arith.constant 0 : i32
    %3 = arith.cmpi eq, %arg1, %c0_i32_1 : i32
    %c0_i32_2 = arith.constant 0 : i32
    %4 = arith.cmpi eq, %arg0, %c0_i32_2 : i32
    %5 = arith.andi %3, %4 : i1
    %6 = arith.extui %5 : i1 to i32
    %c0_i32_3 = arith.constant 0 : i32
    %7 = arith.cmpi ne, %6, %c0_i32_3 : i32
    scf.if %7 {
      %c0_13 = arith.constant 0 : index
      %c0_14 = arith.constant 0 : index
      %30 = vector.load %arg4[%c0_13, %c0_14] : memref<3x128xf32, #tpu.memory_space<vmem>>, vector<3x128xf32>
      %c0_15 = arith.constant 0 : index
      %c0_16 = arith.constant 0 : index
      %31 = vector.load %arg5[%c0_15, %c0_16] : memref<3x128xf32, #tpu.memory_space<vmem>>, vector<3x128xf32>
      %32 = math.log1p %31 : vector<3x128xf32>
      %33 = arith.subf %30, %32 : vector<3x128xf32>
      %34 = arith.mulf %33, %33 : vector<3x128xf32>
      %35 = vector.extract_strided_slice %34 {offsets = [0, 0], sizes = [1, 128], strides = [1, 1]} : vector<3x128xf32> to vector<1x128xf32>
      %36 = vector.shape_cast %35 : vector<1x128xf32> to vector<1x1x128xf32>
      %cst_17 = arith.constant dense<0.000000e+00> : vector<1xf32>
      %37 = vector.multi_reduction <add>, %36, %cst_17 [1, 2] : vector<1x1x128xf32> to vector<1xf32>
      %38 = vector.shape_cast %37 : vector<1xf32> to vector<1x1x1xf32>
      %39 = vector.extract %38[0, 0, 0] : f32 from vector<1x1x1xf32>
      %c0_18 = arith.constant 0 : index
      %40 = memref.load %arg8[%c0_18] : memref<3xf32, #tpu.memory_space<smem>>
      memref.store %39, %arg8[%c0_18] : memref<3xf32, #tpu.memory_space<smem>>
      %41 = vector.extract_strided_slice %34 {offsets = [1, 0], sizes = [1, 128], strides = [1, 1]} : vector<3x128xf32> to vector<1x128xf32>
      %42 = vector.shape_cast %41 : vector<1x128xf32> to vector<1x1x128xf32>
      %cst_19 = arith.constant dense<0.000000e+00> : vector<1xf32>
      %43 = vector.multi_reduction <add>, %42, %cst_19 [1, 2] : vector<1x1x128xf32> to vector<1xf32>
      %44 = vector.shape_cast %43 : vector<1xf32> to vector<1x1x1xf32>
      %45 = vector.extract %44[0, 0, 0] : f32 from vector<1x1x1xf32>
      %c1 = arith.constant 1 : index
      %46 = memref.load %arg8[%c1] : memref<3xf32, #tpu.memory_space<smem>>
      memref.store %45, %arg8[%c1] : memref<3xf32, #tpu.memory_space<smem>>
      %47 = vector.extract_strided_slice %34 {offsets = [2, 0], sizes = [1, 128], strides = [1, 1]} : vector<3x128xf32> to vector<1x128xf32>
      %48 = vector.shape_cast %47 : vector<1x128xf32> to vector<1x1x128xf32>
      %cst_20 = arith.constant dense<0.000000e+00> : vector<1xf32>
      %49 = vector.multi_reduction <add>, %48, %cst_20 [1, 2] : vector<1x1x128xf32> to vector<1xf32>
      %50 = vector.shape_cast %49 : vector<1xf32> to vector<1x1x1xf32>
      %51 = vector.extract %50[0, 0, 0] : f32 from vector<1x1x1xf32>
      %c2 = arith.constant 2 : index
      %52 = memref.load %arg8[%c2] : memref<3xf32, #tpu.memory_space<smem>>
      memref.store %51, %arg8[%c2] : memref<3xf32, #tpu.memory_space<smem>>
    } else {
    }
    %c0 = arith.constant 0 : index
    %c0_4 = arith.constant 0 : index
    %8 = vector.load %arg2[%c0, %c0_4] : memref<16x128xf32, #tpu.memory_space<vmem>>, vector<16x128xf32>
    %c0_5 = arith.constant 0 : index
    %c0_6 = arith.constant 0 : index
    %9 = vector.load %arg3[%c0_5, %c0_6] : memref<16x128xf32, #tpu.memory_space<vmem>>, vector<16x128xf32>
    %10 = arith.subf %8, %9 : vector<16x128xf32>
    %c2_i32 = arith.constant 2 : i32
    %11 = arith.muli %arg0, %c2_i32 : i32
    %12 = arith.addi %11, %arg1 : i32
    %c16_i32 = arith.constant 16 : i32
    %13 = arith.muli %12, %c16_i32 : i32
    %14 = tpu.iota {dimensions = array<i32: 0>} : vector<16x128xi32>
    %15 = vector.broadcast %13 : i32 to vector<16x128xi32>
    %16 = arith.addi %15, %14 : vector<16x128xi32>
    %c20_i32 = arith.constant 20 : i32
    %17 = vector.broadcast %c20_i32 : i32 to vector<16x128xi32>
    %18 = arith.cmpi slt, %16, %17 : vector<16x128xi32>
    %cst = arith.constant 0.000000e+00 : f32
    %19 = vector.broadcast %cst : f32 to vector<16x128xf32>
    %20 = arith.select %18, %10, %19 : vector<16x128xi1>, vector<16x128xf32>
    %21 = arith.mulf %20, %20 : vector<16x128xf32>
    %c0_7 = arith.constant 0 : index
    %c0_8 = arith.constant 0 : index
    %22 = vector.load %arg7[%c0_7, %c0_8] : memref<8x128xf32, #tpu.memory_space<vmem>>, vector<8x128xf32>
    %23 = vector.shape_cast %21 : vector<16x128xf32> to vector<2x8x128xf32>
    %cst_9 = arith.constant dense<0.000000e+00> : vector<8x128xf32>
    %24 = vector.multi_reduction <add>, %23, %cst_9 [0] : vector<2x8x128xf32> to vector<8x128xf32>
    %25 = arith.addf %22, %24 : vector<8x128xf32>
    %c0_10 = arith.constant 0 : index
    %c0_11 = arith.constant 0 : index
    %26 = vector.load %arg7[%c0_10, %c0_11] : memref<8x128xf32, #tpu.memory_space<vmem>>, vector<8x128xf32>
    tpu.vector_store %arg7[%c0_10, %c0_11], %25 {strides = array<i32>} : memref<8x128xf32, #tpu.memory_space<vmem>>, vector<8x128xf32>,
    %c1_i32 = arith.constant 1 : i32
    %27 = arith.cmpi eq, %arg1, %c1_i32 : i32
    %28 = arith.extui %27 : i1 to i32
    %c0_i32_12 = arith.constant 0 : i32
    %29 = arith.cmpi ne, %28, %c0_i32_12 : i32
    scf.if %29 {
      %c0_13 = arith.constant 0 : index
      %c0_14 = arith.constant 0 : index
      %30 = vector.load %arg7[%c0_13, %c0_14] : memref<8x128xf32, #tpu.memory_space<vmem>>, vector<8x128xf32>
      %31 = vector.shape_cast %30 : vector<8x128xf32> to vector<1x8x128xf32>
      %cst_15 = arith.constant dense<0.000000e+00> : vector<1xf32>
      %32 = vector.multi_reduction <add>, %31, %cst_15 [1, 2] : vector<1x8x128xf32> to vector<1xf32>
      %33 = vector.shape_cast %32 : vector<1xf32> to vector<1x1x1xf32>
      %34 = vector.extract %33[0, 0, 0] : f32 from vector<1x1x1xf32>
      %35 = tpu.iota {dimensions = array<i32: 1>} : vector<8x128xi32>
      %36 = tpu.iota {dimensions = array<i32: 0>} : vector<8x128xi32>
      %c0_i32_16 = arith.constant 0 : i32
      %37 = vector.broadcast %c0_i32_16 : i32 to vector<8x128xi32>
      %38 = arith.cmpi eq, %36, %37 : vector<8x128xi32>
      %c0_i32_17 = arith.constant 0 : i32
      %39 = vector.broadcast %c0_i32_17 : i32 to vector<8x128xi32>
      %40 = arith.cmpi eq, %35, %39 : vector<8x128xi32>
      %41 = arith.andi %38, %40 : vector<8x128xi1>
      %cst_18 = arith.constant 0.000000e+00 : f32
      %42 = vector.broadcast %34 : f32 to vector<8x128xf32>
      %43 = vector.broadcast %cst_18 : f32 to vector<8x128xf32>
      %44 = arith.select %41, %42, %43 : vector<8x128xi1>, vector<8x128xf32>
      %c1_i32_19 = arith.constant 1 : i32
      %45 = vector.broadcast %c1_i32_19 : i32 to vector<8x128xi32>
      %46 = arith.cmpi eq, %35, %45 : vector<8x128xi32>
      %47 = arith.andi %38, %46 : vector<8x128xi1>
      %c0_20 = arith.constant 0 : index
      %48 = memref.load %arg8[%c0_20] : memref<3xf32, #tpu.memory_space<smem>>
      %cst_21 = arith.constant 0.000000e+00 : f32
      %49 = vector.broadcast %48 : f32 to vector<8x128xf32>
      %50 = vector.broadcast %cst_21 : f32 to vector<8x128xf32>
      %51 = arith.select %47, %49, %50 : vector<8x128xi1>, vector<8x128xf32>
      %52 = arith.addf %44, %51 : vector<8x128xf32>
      %c2_i32_22 = arith.constant 2 : i32
      %53 = vector.broadcast %c2_i32_22 : i32 to vector<8x128xi32>
      %54 = arith.cmpi eq, %35, %53 : vector<8x128xi32>
      %55 = arith.andi %38, %54 : vector<8x128xi1>
      %c1 = arith.constant 1 : index
      %56 = memref.load %arg8[%c1] : memref<3xf32, #tpu.memory_space<smem>>
      %cst_23 = arith.constant 0.000000e+00 : f32
      %57 = vector.broadcast %56 : f32 to vector<8x128xf32>
      %58 = vector.broadcast %cst_23 : f32 to vector<8x128xf32>
      %59 = arith.select %55, %57, %58 : vector<8x128xi1>, vector<8x128xf32>
      %60 = arith.addf %52, %59 : vector<8x128xf32>
      %c3_i32 = arith.constant 3 : i32
      %61 = vector.broadcast %c3_i32 : i32 to vector<8x128xi32>
      %62 = arith.cmpi eq, %35, %61 : vector<8x128xi32>
      %63 = arith.andi %38, %62 : vector<8x128xi1>
      %c2 = arith.constant 2 : index
      %64 = memref.load %arg8[%c2] : memref<3xf32, #tpu.memory_space<smem>>
      %cst_24 = arith.constant 0.000000e+00 : f32
      %65 = vector.broadcast %64 : f32 to vector<8x128xf32>
      %66 = vector.broadcast %cst_24 : f32 to vector<8x128xf32>
      %67 = arith.select %63, %65, %66 : vector<8x128xi1>, vector<8x128xf32>
      %68 = arith.addf %60, %67 : vector<8x128xf32>
      %c0_25 = arith.constant 0 : index
      %c0_26 = arith.constant 0 : index
      %69 = vector.load %arg6[%c0_25, %c0_26] : memref<8x128xf32, #tpu.memory_space<vmem>>, vector<8x128xf32>
      tpu.vector_store %arg6[%c0_25, %c0_26], %68 {strides = array<i32>} : memref<8x128xf32, #tpu.memory_space<vmem>>, vector<8x128xf32>,
    } else {
    }
    return
  }
  func.func @transform_0(%arg0: i32, %arg1: i32) -> (i32, i32) {
    %c2_i32 = arith.constant 2 : i32
    %0 = arith.muli %arg0, %c2_i32 : i32
    %1 = arith.addi %0, %arg1 : i32
    %c0_i32 = arith.constant 0 : i32
    %c0_i32_0 = arith.constant 0 : i32
    return %1, %c0_i32 : i32, i32
  }
  func.func @transform_1(%arg0: i32, %arg1: i32) -> (i32, i32) {
    %c2_i32 = arith.constant 2 : i32
    %0 = arith.muli %arg0, %c2_i32 : i32
    %1 = arith.addi %0, %arg1 : i32
    %c0_i32 = arith.constant 0 : i32
    %c0_i32_0 = arith.constant 0 : i32
    return %1, %c0_i32 : i32, i32
  }
  func.func @transform_2(%arg0: i32, %arg1: i32) -> (i32, i32) {
    %c0_i32 = arith.constant 0 : i32
    %c0_i32_0 = arith.constant 0 : i32
    %c0_i32_1 = arith.constant 0 : i32
    return %c0_i32, %c0_i32_0 : i32, i32
  }
  func.func @transform_3(%arg0: i32, %arg1: i32) -> (i32, i32) {
    %c0_i32 = arith.constant 0 : i32
    %c0_i32_0 = arith.constant 0 : i32
    %c0_i32_1 = arith.constant 0 : i32
    return %c0_i32, %c0_i32_0 : i32, i32
  }
  func.func @transform_4(%arg0: i32, %arg1: i32) -> (i32, i32) {
    %c0_i32 = arith.constant 0 : i32
    %c0_i32_0 = arith.constant 0 : i32
    return %arg0, %c0_i32 : i32, i32
  }
}

</mosaic_0001>

<llo_original>
// kernel: tpu_custom_call.1
$region0: #{tpu_custom_call.1}
  #allocation0 [shape = 'u32[]', space=smem, size = 0x4, offset = 0x4, fixed_abs, tag = 'smem constant byte address 0x4 - core index']
  #allocation1 [shape = 'u32[144,128]{1,0:T(1,128)}', space=vmem, size = 0x12000, scoped, tag = 'internal scratch']
  #allocation2 [shape = 'f32[8,128]{1,0:T(8,128)}', space=vmem, size = 0x1000, scoped, tag = 'scratch operand']
  #allocation3 [shape = 'f32[3]{0:T(128)}', space=smem, size = 0x200, scoped, tag = 'scratch operand']
  %s0 = inlined_call_operand.hbm [shape: f32[20,128], index: 0, kind: input, shape index: {}]
  %s1 = inlined_call_operand.hbm [shape: f32[20,128], index: 1, kind: input, shape index: {}]
  %s2 = inlined_call_operand.vmem [shape: f32[3,128], index: 2, kind: input, shape index: {}]
  %s3 = inlined_call_operand.vmem [shape: f32[3,128], index: 3, kind: input, shape index: {}]
  %s4 = inlined_call_operand.hbm [shape: f32[8,128], index: 4, kind: output, shape index: {}]
  %s5 = sld [smem:[#allocation0]]
  $region69: #{tpu_custom_call.1} parent=0
    _
  %s7 = ssub.s32 1, %s5
  %s8 = scalar_select 0, %s7, %s5
  $region1: #{tpu_custom_call.1} parent=0
    #allocation4 [shape = 'u8[16384]{0}', space=vmem, size = 0x4000, scoped, tag = 'input window, operand 0']
    #allocation5 [shape = 's32[2]{0}', space=sflag, size = 0x8, scoped, tag = 'scoped memory for tpu_custom_call.1']
    #allocation6 [shape = 's32[2]{0}', space=sflag, size = 0x8, scoped, tag = 'scoped memory for tpu_custom_call.1']
    #allocation7 [shape = 'u8[16384]{0}', space=vmem, size = 0x4000, scoped, tag = 'input window, operand 1']
    #allocation8 [shape = 's32[2]{0}', space=sflag, size = 0x8, scoped, tag = 'scoped memory for tpu_custom_call.1']
    #allocation9 [shape = 'u8[4096]{0}', space=vmem, size = 0x1000, scoped, tag = 'output window, operand 0, single buffered']
    %9 = vsyncpa [#allocation5], 0
    %s10 = scalar_lea.sflag [#allocation5], 1
    %11 = vsyncpa %s10, 0
    %12 = vsyncpa [#allocation8], 0
    %s13 = scalar_lea.sflag [#allocation8], 1
    %14 = vsyncpa %s13, 0
    %15 = vsyncpa [#allocation6], 0
    loop: start=0, step=1, limit=4
    $region2: #{tpu_custom_call.1} parent=1 // loop_pre_header
      _
    $region3: #{tpu_custom_call.1} parent=1 // loop_header
      %s17 = sphi 0, %s21
      %p18 = scmp.ge.s32.totalorder %s17, 4
      %s24 = sphi 0, %s36
      %s25 = sphi 0, %s32
      %s26 = sphi 0, %s24
      %s27 = sphi 0, %s25
      %s28 = sphi 0, %s26
      %s29 = sphi 0, %s27
      %s43 = sphi 0, %s45
      %s46 = sphi 0, %s43
      %s47 = sphi 0, %s46
      %s63 = sphi 0, %s47
      %s73 = sphi 0, %s75
      %s76 = sphi 0, %s73
      %s77 = sphi 0, %s76
      %s93 = sphi 0, %s77
      %s97 = sphi 0, %s97
      %s99 = sphi 0, %s97
      %s100 = sphi 0, %s99
      %s114 = sphi 0, %s100
      %s118 = sphi 0, %s118
      %s120 = sphi 0, %s118
      %s121 = sphi 0, %s120
      %s135 = sphi 0, %s121
      %s141 = sphi 0, %s143
      %s144 = sphi 0, %s141
      %s145 = sphi 0, %s144
      %s161 = sphi 0, %s145
    $region4: #{tpu_custom_call.1} parent=1 // loop_header_branch
      %20 = sbr.rel (%p18) target = $region8
    $region5: #{tpu_custom_call.1} parent=1 // loop_body
      %s22 = ssub.s32 %s17, 1
      %s23 = ssub.s32 %s17, 2
      %s30 = sadd.s32 1, %s25
      %p31 = scmp.ge.s32.totalorder %s30, 2
      %s32 = scalar_select %p31, 0, %s30
      %s33 = sadd.s32 1, %s24
      %s34 = scalar_select %p31, %s33, %s24
      %p35 = scmp.ge.s32.totalorder %s34, 1
      %s36 = scalar_select %p35, 0, %s34
      %s37 = smul.u32 %s24, 2
      %s38 = sadd.s32 %s37, %s25
      %s39 = smul.u32 %s36, 2
      %s40 = sadd.s32 %s39, %s32
      %s41 = ssub.s32 %s38, %s40
      %p42 = scmp.eq.s32.totalorder %s41, 0
      %s44 = sadd.s32 %s43, 1
      %s45 = scalar_select %p42, %s43, %s44
      %p48 = pneg %p42
      %p49 = scmp.eq.s32.totalorder %s17, 1
      %p50 = por %p48, %p49
      %p51 = scmp.ne.s32.totalorder %s43, %s46
      %p52 = scmp.eq.s32.totalorder %s17, 0
      %p53 = por %p51, %p52
      %p54 = scmp.ne.s32.totalorder %s43, %s46
      %p55 = scmp.eq.s32.totalorder %s22, 1
      %p56 = por %p54, %p55
      %p57 = scmp.ne.s32.totalorder %s46, %s47
      %p58 = scmp.eq.s32.totalorder %s22, 0
      %p59 = por %p57, %p58
      %p60 = scmp.ne.s32.totalorder %s46, %s47
      %p61 = scmp.eq.s32.totalorder %s23, 1
      %p62 = por %p60, %p61
      %p64 = scmp.ne.s32.totalorder %s47, %s63
      %p65 = scmp.eq.s32.totalorder %s23, 0
      %p66 = por %p64, %p65
      %s67 = smul.u32 %s24, 2
      %s68 = sadd.s32 %s67, %s25
      %s69 = smul.u32 %s36, 2
      %s70 = sadd.s32 %s69, %s32
      %s71 = ssub.s32 %s68, %s70
      %p72 = scmp.eq.s32.totalorder %s71, 0
      %s74 = sadd.s32 %s73, 1
      %s75 = scalar_select %p72, %s73, %s74
      %p78 = pneg %p72
      %p79 = scmp.eq.s32.totalorder %s17, 1
      %p80 = por %p78, %p79
      %p81 = scmp.ne.s32.totalorder %s73, %s76
      %p82 = scmp.eq.s32.totalorder %s17, 0
      %p83 = por %p81, %p82
      %p84 = scmp.ne.s32.totalorder %s73, %s76
      %p85 = scmp.eq.s32.totalorder %s22, 1
      %p86 = por %p84, %p85
      %p87 = scmp.ne.s32.totalorder %s76, %s77
      %p88 = scmp.eq.s32.totalorder %s22, 0
      %p89 = por %p87, %p88
      %p90 = scmp.ne.s32.totalorder %s76, %s77
      %p91 = scmp.eq.s32.totalorder %s23, 1
      %p92 = por %p90, %p91
      %p94 = scmp.ne.s32.totalorder %s77, %s93
      %p95 = scmp.eq.s32.totalorder %s23, 0
      %p96 = por %p94, %p95
      %s98 = sadd.s32 %s97, 1
      %p101 = scmp.eq.s32.totalorder %s17, 1
      %p102 = scmp.ne.s32.totalorder %s97, %s99
      %p103 = scmp.eq.s32.totalorder %s17, 0
      %p104 = por %p102, %p103
      %p105 = scmp.ne.s32.totalorder %s97, %s99
      %p106 = scmp.eq.s32.totalorder %s22, 1
      %p107 = por %p105, %p106
      %p108 = scmp.ne.s32.totalorder %s99, %s100
      %p109 = scmp.eq.s32.totalorder %s22, 0
      %p110 = por %p108, %p109
      %p111 = scmp.ne.s32.totalorder %s99, %s100
      %p112 = scmp.eq.s32.totalorder %s23, 1
      %p113 = por %p111, %p112
      %p115 = scmp.ne.s32.totalorder %s100, %s114
      %p116 = scmp.eq.s32.totalorder %s23, 0
      %p117 = por %p115, %p116
      %s119 = sadd.s32 %s118, 1
      %p122 = scmp.eq.s32.totalorder %s17, 1
      %p123 = scmp.ne.s32.totalorder %s118, %s120
      %p124 = scmp.eq.s32.totalorder %s17, 0
      %p125 = por %p123, %p124
      %p126 = scmp.ne.s32.totalorder %s118, %s120
      %p127 = scmp.eq.s32.totalorder %s22, 1
      %p128 = por %p126, %p127
      %p129 = scmp.ne.s32.totalorder %s120, %s121
      %p130 = scmp.eq.s32.totalorder %s22, 0
      %p131 = por %p129, %p130
      %p132 = scmp.ne.s32.totalorder %s120, %s121
      %p133 = scmp.eq.s32.totalorder %s23, 1
      %p134 = por %p132, %p133
      %p136 = scmp.ne.s32.totalorder %s121, %s135
      %p137 = scmp.eq.s32.totalorder %s23, 0
      %p138 = por %p136, %p137
      %s139 = ssub.s32 %s24, %s36
      %p140 = scmp.eq.s32.totalorder %s139, 0
      %s142 = sadd.s32 %s141, 1
      %s143 = scalar_select %p140, %s141, %s142
      %p146 = pneg %p140
      %p147 = scmp.eq.s32.totalorder %s17, 1
      %p148 = por %p146, %p147
      %p149 = scmp.ne.s32.totalorder %s141, %s144
      %p150 = scmp.eq.s32.totalorder %s17, 0
      %p151 = por %p149, %p150
      %p152 = scmp.ne.s32.totalorder %s141, %s144
      %p153 = scmp.eq.s32.totalorder %s22, 1
      %p154 = por %p152, %p153
      %p155 = scmp.ne.s32.totalorder %s144, %s145
      %p156 = scmp.eq.s32.totalorder %s22, 0
      %p157 = por %p155, %p156
      %p158 = scmp.ne.s32.totalorder %s144, %s145
      %p159 = scmp.eq.s32.totalorder %s23, 1
      %p160 = por %p158, %p159
      %p162 = scmp.ne.s32.totalorder %s145, %s161
      %p163 = scmp.eq.s32.totalorder %s23, 0
      %p164 = por %p162, %p163
      %p165 = scmp.le.s32.totalorder 1, %s17
      %p166 = scmp.lt.s32.totalorder %s17, 3
      %p167 = pnand %p165, %p166
      %p168 = pneg %p167
      // Predicated region
      $region9: #{tpu_custom_call.1} parent=5 // pred_check
        _
      $region10: #{tpu_custom_call.1} parent=5 // pred_check_branch
        %170 = sbr.rel (%p167) target = $region12
      $region11: #{tpu_custom_call.1} parent=5 // pred_region
        %s171 = ssub.s32 %s17, 1
        // Predicated region
        $region13: #{tpu_custom_call.1} parent=11 // pred_check
          %p172 = pneg %p110
        $region14: #{tpu_custom_call.1} parent=11 // pred_check_branch
          %174 = sbr.rel (%p172) target = $region16
        $region15: #{tpu_custom_call.1} parent=11 // pred_region
          _
        $region16: #{tpu_custom_call.1} parent=11 // pred_fallthru
          _
        // Predicated region
        $region17: #{tpu_custom_call.1} parent=11 // pred_check
          %p175 = pneg %p131
        $region18: #{tpu_custom_call.1} parent=11 // pred_check_branch
          %177 = sbr.rel (%p175) target = $region20
        $region19: #{tpu_custom_call.1} parent=11 // pred_region
          _
        $region20: #{tpu_custom_call.1} parent=11 // pred_fallthru
          _
      $region12: #{tpu_custom_call.1} parent=5 // pred_fallthru
        _
      %p178 = scmp.lt.s32.totalorder %s17, 2
      // Predicated region
      $region21: #{tpu_custom_call.1} parent=5 // pred_check
        %p179 = pneg %p178
      $region22: #{tpu_custom_call.1} parent=5 // pred_check_branch
        %181 = sbr.rel (%p179) target = $region24
      $region23: #{tpu_custom_call.1} parent=5 // pred_region
        // Predicated region
        $region25: #{tpu_custom_call.1} parent=23 // pred_check
          %p182 = pneg %p53
        $region26: #{tpu_custom_call.1} parent=23 // pred_check_branch
          %184 = sbr.rel (%p182) target = $region28
        $region27: #{tpu_custom_call.1} parent=23 // pred_region
          %s185 = sand.u32 %s43, 1
          %s186 = scalar_lea.sflag [#allocation5], %s185
          %s187 = sand.u32 %s43, 1
          %s188 = smul.addr %s187, 16
          %s189 = scalar_lea.vmem [#allocation4], %s188
          %s190 = smul.u32 %s24, 2
          %s191 = sadd.s32 %s190, %s25
          %s192 = smul.u32 2, %s191
          %s193 = ssub.s32 3, %s192
          %p194 = scmp.lt.s32.totalorder %s193, 2
          %s195 = scalar_select %p194, %s193, 2
          %s196 = smul.u32 128, %s195
          %s198 = ssub.s32 256, %s196
          %199 = vsyncadd %s186, %s198
          %p200 = scmp.ne.s32.totalorder 0, %s196
          %s201 = smul.addr %s192, 128
          %s202 = scalar_lea.hbm %s0, %s201
          %s203 = smul.u32 8, %s195
          %s204 = sshll.u32 %s189, 4
          %s205 = int_to_ptr.vmem [resolvable:$true] %s204
          %s206 = sshll.u32 %s203, 4
          %210 = dma.hbm_to_vmem [thread:$0]  (%p200), %s202, %s206, %s205, %s186, 128, 128, 8
        $region28: #{tpu_custom_call.1} parent=23 // pred_fallthru
          _
        // Predicated region
        $region29: #{tpu_custom_call.1} parent=23 // pred_check
          %p211 = pneg %p83
        $region30: #{tpu_custom_call.1} parent=23 // pred_check_branch
          %213 = sbr.rel (%p211) target = $region32
        $region31: #{tpu_custom_call.1} parent=23 // pred_region
          %s214 = sand.u32 %s73, 1
          %s215 = scalar_lea.sflag [#allocation8], %s214
          %s216 = sand.u32 %s73, 1
          %s217 = smul.addr %s216, 16
          %s218 = scalar_lea.vmem [#allocation7], %s217
          %s219 = smul.u32 %s24, 2
          %s220 = sadd.s32 %s219, %s25
          %s221 = smul.u32 2, %s220
          %s222 = ssub.s32 3, %s221
          %p223 = scmp.lt.s32.totalorder %s222, 2
          %s224 = scalar_select %p223, %s222, 2
          %s225 = smul.u32 128, %s224
          %s227 = ssub.s32 256, %s225
          %228 = vsyncadd %s215, %s227
          %p229 = scmp.ne.s32.totalorder 0, %s225
          %s230 = smul.addr %s221, 128
          %s231 = scalar_lea.hbm %s1, %s230
          %s232 = smul.u32 8, %s224
          %s233 = sshll.u32 %s218, 4
          %s234 = int_to_ptr.vmem [resolvable:$true] %s233
          %s235 = sshll.u32 %s232, 4
          %239 = dma.hbm_to_vmem [thread:$0]  (%p229), %s231, %s235, %s234, %s215, 128, 128, 8
        $region32: #{tpu_custom_call.1} parent=23 // pred_fallthru
          _
      $region24: #{tpu_custom_call.1} parent=5 // pred_fallthru
        _
      %p240 = scmp.le.s32.totalorder 1, %s17
      %p241 = scmp.lt.s32.totalorder %s17, 3
      %p242 = pnand %p240, %p241
      %p243 = pneg %p242
      // Predicated region
      $region33: #{tpu_custom_call.1} parent=5 // pred_check
        _
      $region34: #{tpu_custom_call.1} parent=5 // pred_check_branch
        %245 = sbr.rel (%p242) target = $region36
      $region35: #{tpu_custom_call.1} parent=5 // pred_region
        %s246 = ssub.s32 %s17, 1
        %s247 = sand.u32 %s46, 1
        %s248 = scalar_lea.sflag [#allocation5], %s247
        %s249 = sand.u32 %s46, 1
        %s250 = smul.addr %s249, 16
        %s251 = scalar_lea.vmem [#allocation4], %s250
        // Predicated region
        $region37: #{tpu_custom_call.1} parent=35 // pred_check
          %p252 = pneg %p59
        $region38: #{tpu_custom_call.1} parent=35 // pred_check_branch
          %254 = sbr.rel (%p252) target = $region40
        $region39: #{tpu_custom_call.1} parent=35 // pred_region
          %255 = dma.done %s248, 256
        $region40: #{tpu_custom_call.1} parent=35 // pred_fallthru
          _
        %s256 = sand.u32 %s76, 1
        %s257 = scalar_lea.sflag [#allocation8], %s256
        %s258 = sand.u32 %s76, 1
        %s259 = smul.addr %s258, 16
        %s260 = scalar_lea.vmem [#allocation7], %s259
        // Predicated region
        $region41: #{tpu_custom_call.1} parent=35 // pred_check
          %p261 = pneg %p89
        $region42: #{tpu_custom_call.1} parent=35 // pred_check_branch
          %263 = sbr.rel (%p261) target = $region44
        $region43: #{tpu_custom_call.1} parent=35 // pred_region
          %264 = dma.done %s257, 256
        $region44: #{tpu_custom_call.1} parent=35 // pred_fallthru
          _
        %s265 = sand.u32 %s46, 1
        %s266 = scalar_lea.sflag [#allocation5], %s265
        %s267 = sand.u32 %s46, 1
        %s268 = smul.addr %s267, 16
        %s269 = scalar_lea.vmem [#allocation4], %s268
        %p270 = pneg %p59
        %p271 = pneg %p56
        %s272 = sand.u32 %s76, 1
        %s273 = scalar_lea.sflag [#allocation8], %s272
        %s274 = sand.u32 %s76, 1
        %s275 = smul.addr %s274, 16
        %s276 = scalar_lea.vmem [#allocation7], %s275
        %p277 = pneg %p89
        %p278 = pneg %p86
        %p279 = pneg %p110
        %p280 = pneg %p107
        %p281 = pneg %p131
        %p282 = pneg %p128
        %p283 = pneg %p157
        %p284 = pneg %p154
        %s285 = smul.u32 %s26, 2
        %s286 = sadd.s32 %s285, %s27
        %s287 = smul.u32 2, %s286
        %s288 = ssub.s32 3, %s287
        %p289 = scmp.lt.s32.totalorder %s288, 2
        %s290 = scalar_select %p289, %s288, 2
        %s291 = smul.u32 128, %s290
        %s292 = smul.u32 %s26, 2
        %s293 = sadd.s32 %s292, %s27
        %s294 = smul.u32 2, %s293
        %s295 = ssub.s32 3, %s294
        %p296 = scmp.lt.s32.totalorder %s295, 2
        %s297 = scalar_select %p296, %s295, 2
        %s298 = smul.u32 128, %s297
        %p299 = scmp.eq.s32.totalorder %s27, 0
        // Predicated region
        $region45: #{tpu_custom_call.1} parent=35 // pred_check
          %p300 = pneg %p299
        $region46: #{tpu_custom_call.1} parent=35 // pred_check_branch
          %302 = sbr.rel (%p300) target = $region48
        $region47: #{tpu_custom_call.1} parent=35 // pred_region
          %303 = vst [vmem:[#allocation2] sm:$0xff] 0.0
          %s304 = scalar_lea.smem [#allocation3], 0
          %305 = sst [smem:[%s304]] 0.0
          %s306 = scalar_lea.smem [#allocation3], 1
          %307 = sst [smem:[%s306]] 0.0
          %s308 = scalar_lea.smem [#allocation3], 2
          %309 = sst [smem:[%s308]] 0.0
        $region48: #{tpu_custom_call.1} parent=35 // pred_fallthru
          _
        %p310 = scmp.eq.s32.totalorder %s26, 0
        %p311 = pnand %p299, %p310
        %p312 = pneg %p311
        // Predicated region
        $region49: #{tpu_custom_call.1} parent=35 // pred_check
          _
        $region50: #{tpu_custom_call.1} parent=35 // pred_check_branch
          %314 = sbr.rel (%p311) target = $region52
        $region51: #{tpu_custom_call.1} parent=35 // pred_region
          %v315 = vld [vmem:[%s2] sm:$0x7]
          %v316 = vld [vmem:[%s3] sm:$0x7]
          %v317 = vadd.f32 %v316, 1.0
          %v318 = vlog2.pop %v317
          %v319 = vmul.f32 %v318, 0.6931472
          %v320 = vmul.f32 -0.5, %v316
          %v321 = vadd.f32 %v320, 1.0
          %v322 = vmul.f32 %v321, %v316
          %v323 = vand.u32 2147483647, %v316
          %vm324 = vcmp.lt.f32.partialorder %v323, 0.0004427343
          %v325 = vsel %vm324, %v322, %v319
          %v326 = vsub.f32 %v315, %v325
          %v327 = vmul.f32 %v326, %v326
          %vm328 = vcmask 1040384
          %v329 = vsel %vm328, %v327, 0.0
          %330 = vadd.xlane.f32.xlu0 %v329
          %v331 = vpop.xlane.xlu0 %330
          %v332 = vrot.slane %v331, 4
          %v333 = vadd.f32 %v331, %v332
          %v334 = vrot.slane %v333, 2
          %v335 = vadd.f32 %v333, %v334
          %v336 = vrot.slane %v335, 1
          %v337 = vadd.f32 %v335, %v336
          %s338 = vtos %v337
          %s339 = scalar_lea.smem [#allocation3], 0
          %340 = sst [smem:[%s339]] %s338
          %v342 = vrot.slane %v327, 1
          %v344 = vsel %vm328, %v342, 0.0
          %345 = vadd.xlane.f32.xlu0 %v344
          %v346 = vpop.xlane.xlu0 %345
          %v347 = vrot.slane %v346, 4
          %v348 = vadd.f32 %v346, %v347
          %v349 = vrot.slane %v348, 2
          %v350 = vadd.f32 %v348, %v349
          %v351 = vrot.slane %v350, 1
          %v352 = vadd.f32 %v350, %v351
          %s353 = vtos %v352
          %s354 = scalar_lea.smem [#allocation3], 1
          %355 = sst [smem:[%s354]] %s353
          %v356 = vrot.slane %v327, 2
          %v358 = vsel %vm328, %v356, 0.0
          %359 = vadd.xlane.f32.xlu0 %v358
          %v360 = vpop.xlane.xlu0 %359
          %v361 = vrot.slane %v360, 4
          %v362 = vadd.f32 %v360, %v361
          %v363 = vrot.slane %v362, 2
          %v364 = vadd.f32 %v362, %v363
          %v365 = vrot.slane %v364, 1
          %v366 = vadd.f32 %v364, %v365
          %s367 = vtos %v366
          %s368 = scalar_lea.smem [#allocation3], 2
          %369 = sst [smem:[%s368]] %s367
        $region52: #{tpu_custom_call.1} parent=35 // pred_fallthru
          _
        %v370 = vld [vmem:[%s251] sm:$0xff]
        %v371 = vld [vmem:[%s251 + $0x8] sm:$0xff]
        %v372 = vld [vmem:[%s260] sm:$0xff]
        %v373 = vld [vmem:[%s260 + $0x8] sm:$0xff]
        %v374 = vsub.f32 %v370, %v372
        %v375 = vsub.f32 %v371, %v373
        %s376 = smul.u32 %s26, 2
        %s377 = sadd.s32 %s376, %s27
        %s378 = smul.u32 %s377, 16
        %v379 = vlaneseq
        %v380 = vshrl.u32 %v379, 7
        %v381 = vadd.s32 %v380, 8
        %v382 = vstv %s378
        %v383 = vadd.s32 %v382, %v380
        %v384 = vadd.s32 %v382, %v381
        %vm385 = vcmp.lt.s32.totalorder %v383, 20
        %vm386 = vcmp.lt.s32.totalorder %v384, 20
        %v387 = vsel %vm385, %v374, 0.0
        %v388 = vsel %vm386, %v375, 0.0
        %v389 = vmul.f32 %v387, %v387
        %v390 = vmul.f32 %v388, %v388
        %v391 = vld [vmem:[#allocation2] sm:$0xff]
        %v392 = vadd.f32 %v389, %v390
        %v393 = vadd.f32 %v391, %v392
        %394 = vst [vmem:[#allocation2] sm:$0xff] %v393
        %p395 = scmp.eq.s32.totalorder %s27, 1
        // Predicated region
        $region53: #{tpu_custom_call.1} parent=35 // pred_check
          %p396 = pneg %p395
        $region54: #{tpu_custom_call.1} parent=35 // pred_check_branch
          %398 = sbr.rel (%p396) target = $region56
        $region55: #{tpu_custom_call.1} parent=35 // pred_region
          %v399 = vld [vmem:[#allocation2] sm:$0xff]
          %400 = vadd.xlane.f32.xlu0 %v399
          %v401 = vpop.xlane.xlu0 %400
          %v402 = vrot.slane %v401, 4
          %v403 = vadd.f32 %v401, %v402
          %v404 = vrot.slane %v403, 2
          %v405 = vadd.f32 %v403, %v404
          %v406 = vrot.slane %v405, 1
          %v407 = vadd.f32 %v405, %v406
          %s408 = vtos %v407
          %v409 = vlaneseq
          %v410 = vand.u32 %v409, 127
          %vm411 = vcmp.eq.s32.totalorder %v380, 0
          %vm412 = vcmp.eq.s32.totalorder %v410, 0
          %vm413 = vmand %vm411, %vm412
          %v414 = vstv %s408
          %v415 = vsel %vm413, %v414, 0.0
          %vm416 = vcmp.eq.s32.totalorder %v410, 1
          %vm417 = vmand %vm411, %vm416
          %s418 = sld [smem:[#allocation3]]
          %v419 = vstv %s418
          %v420 = vsel %vm417, %v419, 0.0
          %v421 = vadd.f32 %v415, %v420
          %vm422 = vcmp.eq.s32.totalorder %v410, 2
          %vm423 = vmand %vm411, %vm422
          %s424 = sld [smem:[#allocation3 + $0x1]]
          %v425 = vstv %s424
          %v426 = vsel %vm423, %v425, 0.0
          %v427 = vadd.f32 %v421, %v426
          %vm428 = vcmp.eq.s32.totalorder %v410, 3
          %vm429 = vmand %vm411, %vm428
          %s430 = sld [smem:[#allocation3 + $0x2]]
          %v431 = vstv %s430
          %v432 = vsel %vm429, %v431, 0.0
          %v433 = vadd.f32 %v427, %v432
          %434 = vst [vmem:[#allocation9] sm:$0xff] %v433
        $region56: #{tpu_custom_call.1} parent=35 // pred_fallthru
          _
        // Predicated region
        $region57: #{tpu_custom_call.1} parent=35 // pred_check
          %p435 = pneg %p154
        $region58: #{tpu_custom_call.1} parent=35 // pred_check_branch
          %437 = sbr.rel (%p435) target = $region60
        $region59: #{tpu_custom_call.1} parent=35 // pred_region
          %s439 = ssub.s32 128, 128
          %440 = vsyncadd [#allocation6], %s439
          %s441 = smul.addr %s26, 128
          %s442 = scalar_lea.hbm %s4, %s441
          %s444 = sshll.u32 [#allocation9], 4
          %s445 = int_to_ptr.vmem [resolvable:$true] %s444
          %447 = dma.vmem_to_hbm [thread:$0]  %s445, 128, %s442, [#allocation6]
        $region60: #{tpu_custom_call.1} parent=35 // pred_fallthru
          _
        // Predicated region
        $region61: #{tpu_custom_call.1} parent=35 // pred_check
          %p448 = pneg %p154
        $region62: #{tpu_custom_call.1} parent=35 // pred_check_branch
          %450 = sbr.rel (%p448) target = $region64
        $region63: #{tpu_custom_call.1} parent=35 // pred_region
          %451 = dma.done [#allocation6], 128
        $region64: #{tpu_custom_call.1} parent=35 // pred_fallthru
          _
      $region36: #{tpu_custom_call.1} parent=5 // pred_fallthru
        _
      %p452 = scmp.le.s32.totalorder 2, %s17
      // Predicated region
      $region65: #{tpu_custom_call.1} parent=5 // pred_check
        %p453 = pneg %p452
      $region66: #{tpu_custom_call.1} parent=5 // pred_check_branch
        %455 = sbr.rel (%p453) target = $region68
      $region67: #{tpu_custom_call.1} parent=5 // pred_region
        %s456 = ssub.s32 %s17, 2
      $region68: #{tpu_custom_call.1} parent=5 // pred_fallthru
        _
    $region6: #{tpu_custom_call.1} parent=1 // loop_footer
      %s21 = sadd.s32 1, %s17
    $region7: #{tpu_custom_call.1} parent=1 // loop_footer_branch
      %16 = sbr.rel target = $region3
    $region8: #{tpu_custom_call.1} parent=1 // loop_exit
      _
    %457 = vsyncpa [#allocation5], 1
    %s458 = scalar_lea.sflag [#allocation5], 1
    %459 = vsyncpa %s458, 1
    %460 = vsyncpa [#allocation8], 1
    %s461 = scalar_lea.sflag [#allocation8], 1
    %462 = vsyncpa %s461, 1
    %463 = vsyncpa [#allocation6], 1
    %s464 = scalar_lea.sflag [#allocation6], 1
    %465 = vsyncpa %s464, 1

</llo_original>
